<compile_context>
chip_gen: v6e
topology: v6e:2x2x1
jax: 0.10.0
libtpu: 0.0.40
codegen_flags: <defaults>
</compile_context>

<pallas_src>
import functools

import numpy as np
import jax
import jax.numpy as jnp
from jax import lax
from jax.experimental import pallas as pl
from jax.experimental.pallas import tpu as pltpu

_LANE = 128


def _pose_geo_kernel(xyz_ref, x_ref, o_ref, *, in_dim, feat_dim, alpha, beta,
                     tn, group_aligned, split_halves):
    """One (batch, lane-tile) grid step.

    xyz_ref: (in_dim, TN); x_ref / o_ref: (out_dim, TN).  Batch dim squeezed.
    Frequency / phase constants are compile-time (no constant inputs, no extra
    DMAs) and broadcast to lane width once per step.
    """
    two_f = 2 * feat_dim
    neg_log_alpha = np.float32(-np.log(float(alpha)) / float(feat_dim))
    beta_f = np.float32(beta)

    if split_halves:
        # feat_dim is sublane-aligned: one theta per xyz row, sin/cos halves
        # stored to aligned row groups (no phase add, half the multiplies).
        f = lax.broadcasted_iota(jnp.int32, (feat_dim, 1), 0).astype(jnp.float32)
        coefs = beta_f * jnp.exp(f * neg_log_alpha)              # (feat_dim, 1)
        coefs_b = jnp.broadcast_to(coefs, (feat_dim, tn))        # hoisted splat
        phases_b = None
    else:
        # cos(x) = sin(x + pi/2): a single sin over the whole channel group.
        row = lax.broadcasted_iota(jnp.int32, (two_f, 1), 0)
        is_cos = row >= feat_dim
        f = jnp.where(is_cos, row - feat_dim, row).astype(jnp.float32)
        coefs = beta_f * jnp.exp(f * neg_log_alpha)              # (two_f, 1)
        phases = jnp.where(is_cos, np.float32(np.pi / 2), np.float32(0.0))
        coefs_b = jnp.broadcast_to(coefs, (two_f, tn))           # hoisted splats
        phases_b = jnp.broadcast_to(phases, (two_f, tn))

    pe_groups = []   # only used on the unaligned-group fallback path
    for i in range(in_dim):          # tiny static unroll over xyz channels
        r0 = i * two_f
        # (1, TN) row; the sublane broadcast happens inside the multiply.
        # TODO(synk): switch to a stride-0 sublane-broadcast load
        # (xyz_ref[pl.ds(i, two_f, stride=0), :]) once verified to lower on
        # the deployed Mosaic; it moves the splat onto the vld slot.
        xi = xyz_ref[pl.ds(i, 1), :].astype(jnp.float32)

        if split_halves:
            theta = xi * coefs_b                                  # (feat_dim, TN)
            pe_sin = jnp.sin(theta)
            pe_cos = jnp.cos(theta)
            xs = x_ref[pl.ds(r0, feat_dim), :]
            xc = x_ref[pl.ds(r0 + feat_dim, feat_dim), :]
            o_ref[pl.ds(r0, feat_dim), :] = ((xs + pe_sin) * pe_sin).astype(o_ref.dtype)
            o_ref[pl.ds(r0 + feat_dim, feat_dim), :] = ((xc + pe_cos) * pe_cos).astype(o_ref.dtype)
        else:
            theta = xi * coefs_b + phases_b                       # (two_f, TN)
            pe = jnp.sin(theta)
            if group_aligned:
                xw = x_ref[pl.ds(r0, two_f), :]
                o_ref[pl.ds(r0, two_f), :] = ((xw + pe) * pe).astype(o_ref.dtype)
            else:
                pe_groups.append(pe)

    if not group_aligned:
        # two_f is not a sublane multiple: avoid unaligned row-group stores by
        # assembling the full tile once and doing a single lane-dense store.
        pe = jnp.concatenate(pe_groups, axis=0)                   # (out_dim, TN)
        xw = x_ref[...]
        o_ref[...] = ((xw + pe) * pe).astype(o_ref.dtype)


def _pick_tn(n, in_dim, out_dim, batch, xyz_itemsize, x_itemsize, tn=None):
    """Choose the lane-tile width (a multiple of 128)."""
    n_al = pl.cdiv(n, _LANE) * _LANE
    bytes_per_lane = in_dim * xyz_itemsize + 2 * out_dim * x_itemsize
    # Amortize the ~0.35us fixed per-grid-step overhead: aim for >= ~3 MiB of
    # HBM traffic per step.
    tn_target = max(_LANE, (3 << 20) // bytes_per_lane // _LANE * _LANE)
    # Keep the double-buffered working set well inside the 32 MiB scoped VMEM
    # budget requested below (portable across v5e / v6e / v7x).
    tn_vmem = max(_LANE, (12 << 20) // (2 * bytes_per_lane) // _LANE * _LANE)
    pick = min(tn_target, tn_vmem, n_al)
    if tn is not None:
        pick = min(pick, max(_LANE, int(tn) // _LANE * _LANE))
    # Keep enough grid steps for v7x megacore sharding and DMA/compute
    # double-buffering even when the batch is tiny.
    min_steps = 8
    tiles_needed = -(-min_steps // max(int(batch), 1))
    if tiles_needed > 1:
        cap = max(_LANE, n_al // tiles_needed // _LANE * _LANE)
        pick = min(pick, cap)
    # Balance tile sizes so the masked ragged tail wastes < 128 lanes.
    num_tiles = -(-n_al // pick)
    pick = pl.cdiv(pl.cdiv(n_al, num_tiles), _LANE) * _LANE
    return pick


@functools.partial(jax.jit, static_argnames=("alpha", "beta", "tn"))
def pose_geo(knn_xyz, knn_x, *, alpha, beta, tn=None):
    """knn_xyz: (B, in_dim, G, K); knn_x: (B, out_dim, G, K)."""
    B, in_dim, G, K = knn_xyz.shape
    _, out_dim, _, _ = knn_x.shape
    feat_dim = out_dim // (in_dim * 2)
    assert in_dim * 2 * feat_dim == out_dim, "out_dim must equal in_dim*2*feat_dim"
    two_f = 2 * feat_dim
    N = G * K

    # Contiguous reshapes are metadata-only (no extra HBM pass).
    xyz_flat = knn_xyz.reshape(B, in_dim, N)
    x_flat = knn_x.reshape(B, out_dim, N)

    xyz_isz = jnp.dtype(knn_xyz.dtype).itemsize
    x_isz = jnp.dtype(knn_x.dtype).itemsize
    min_sublane = max(1, 32 // x_isz)            # 8 for f32, 16 for bf16
    group_aligned = (two_f % min_sublane == 0)
    split_halves = group_aligned and (feat_dim % min_sublane == 0)

    TN = _pick_tn(N, in_dim, out_dim, B, xyz_isz, x_isz, tn=tn)
    num_tiles = pl.cdiv(N, TN)   # ragged last tile -> masked writeback

    kernel = functools.partial(
        _pose_geo_kernel, in_dim=in_dim, feat_dim=feat_dim,
        alpha=float(alpha), beta=float(beta), tn=TN,
        group_aligned=group_aligned, split_halves=split_halves)

    cost = pl.CostEstimate(
        flops=4 * B * out_dim * N,
        transcendentals=B * out_dim * N,
        bytes_accessed=B * N * (in_dim * xyz_isz + 2 * out_dim * x_isz))

    out_flat = pl.pallas_call(
        kernel,
        out_shape=jax.ShapeDtypeStruct((B, out_dim, N), knn_x.dtype),
        grid_spec=pltpu.PrefetchScalarGridSpec(
            num_scalar_prefetch=0,
            grid=(B, num_tiles),
            in_specs=[
                pl.BlockSpec((None, in_dim, TN), lambda b, n: (b, 0, n)),
                pl.BlockSpec((None, out_dim, TN), lambda b, n: (b, 0, n)),
            ],
            out_specs=pl.BlockSpec((None, out_dim, TN), lambda b, n: (b, 0, n)),
        ),
        compiler_params=pltpu.CompilerParams(
            dimension_semantics=("parallel", "parallel"),
            vmem_limit_bytes=32 * 1024 * 1024),
        cost_estimate=cost,
    )(xyz_flat, x_flat)

    return out_flat.reshape(B, out_dim, G, K)


def pose_geo_reference(knn_xyz, knn_x, *, alpha, beta):
    """Pure-JAX reference mirroring the PyTorch forward exactly."""
    B, in_dim, G, K = knn_xyz.shape
    out_dim = knn_x.shape[1]
    feat_dim = out_dim // (in_dim * 2)
    feat_range = jnp.arange(feat_dim, dtype=jnp.float32)
    dim_embed = jnp.power(jnp.float32(alpha), feat_range / feat_dim)
    div_embed = (beta * knn_xyz[..., None]) / dim_embed   # (B, in_dim, G, K, feat_dim)
    sin_e = jnp.sin(div_embed)
    cos_e = jnp.cos(div_embed)
    pe = jnp.concatenate([sin_e, cos_e], axis=-1)          # (B, in_dim, G, K, 2*feat_dim)
    pe = jnp.transpose(pe, (0, 1, 4, 2, 3)).reshape(B, out_dim, G, K)
    return (knn_x + pe) * pe


if __name__ == "__main__":
    key = jax.random.PRNGKey(0)
    k1, k2, k3, k4 = jax.random.split(key, 4)

    # Case 1: in_dim=3, feat_dim=4 (out_dim=24) -> phase-trick path,
    # N = 16*8 = 128 (exact lane multiple), B=2.
    B, in_dim, G, K = 2, 3, 16, 8
    out_dim, alpha, beta = 24, 1000.0, 100.0
    knn_xyz = jax.random.uniform(k1, (B, in_dim, G, K), jnp.float32, -1.0, 1.0)
    knn_x = jax.random.normal(k2, (B, out_dim, G, K), dtype=jnp.float32)
    out = jax.block_until_ready(pose_geo(knn_xyz, knn_x, alpha=alpha, beta=beta))
    ref = pose_geo_reference(knn_xyz, knn_x, alpha=alpha, beta=beta)
    assert out.shape == knn_x.shape
    # Folded f32 coefficient + cos(x)=sin(x+pi/2) perturb the sin argument by a
    # few ulps; with beta*|xyz| ~ 1e2 this amplifies to ~1e-4 absolute.
    assert jnp.allclose(out, ref, atol=5e-4, rtol=1e-4), "case 1 mismatch vs reference"

    # Case 2: feat_dim=8 (split sin/cos path), ragged N = 18*10 = 180
    # (masked last lane block), B=1.
    B2, in2, G2, K2 = 1, 3, 18, 10
    out2, alpha2, beta2 = 48, 100.0, 50.0
    knn_xyz2 = jax.random.uniform(k3, (B2, in2, G2, K2), jnp.float32, -1.0, 1.0)
    knn_x2 = jax.random.normal(k4, (B2, out2, G2, K2), dtype=jnp.float32)
    o2 = jax.block_until_ready(pose_geo(knn_xyz2, knn_x2, alpha=alpha2, beta=beta2))
    r2 = pose_geo_reference(knn_xyz2, knn_x2, alpha=alpha2, beta=beta2)
    assert o2.shape == knn_x2.shape
    assert jnp.allclose(o2, r2, atol=5e-4, rtol=1e-4), "case 2 mismatch vs reference"

    print("KERNEL_OK")
</pallas_src>

<mosaic_0001>
module attributes {stable_mosaic.version = 11 : i64} {
  func.func @_pose_geo_kernel(%arg0: i32, %arg1: i32, %arg2: memref<1x3x128xf32, #tpu.memory_space<vmem>>, %arg3: memref<1x24x128xf32, #tpu.memory_space<vmem>>, %arg4: memref<1x24x128xf32, #tpu.memory_space<vmem>>) attributes {dimension_semantics = [#tpu.dimension_semantics<parallel>, #tpu.dimension_semantics<parallel>], iteration_bounds = array<i64: 2, 1>, scalar_prefetch = 0 : i64, scratch_operands = 0 : i64, tpu.core_type = #tpu.core_type<tc>, window_params = [{transform_indices = @transform_0, window_bounds = array<i64: 1, 3, 128>}, {transform_indices = @transform_1, window_bounds = array<i64: 1, 24, 128>}, {transform_indices = @transform_2, window_bounds = array<i64: 1, 24, 128>}]} {
    %0 = tpu.iota {dimensions = array<i32: 0>} : vector<8x1xi32>
    %c4_i32 = arith.constant 4 : i32
    %1 = vector.broadcast %c4_i32 : i32 to vector<8x1xi32>
    %2 = arith.cmpi sge, %0, %1 : vector<8x1xi32>
    %c4_i32_0 = arith.constant 4 : i32
    %3 = vector.broadcast %c4_i32_0 : i32 to vector<8x1xi32>
    %4 = arith.subi %0, %3 : vector<8x1xi32>
    %5 = arith.select %2, %4, %0 : vector<8x1xi1>, vector<8x1xi32>
    %6 = arith.sitofp %5 : vector<8x1xi32> to vector<8x1xf32>
    %cst = arith.constant -1.72693884 : f32
    %7 = vector.broadcast %cst : f32 to vector<8x1xf32>
    %8 = arith.mulf %6, %7 : vector<8x1xf32>
    %9 = math.exp %8 : vector<8x1xf32>
    %cst_1 = arith.constant 1.000000e+02 : f32
    %10 = vector.broadcast %cst_1 : f32 to vector<8x1xf32>
    %11 = arith.mulf %10, %9 : vector<8x1xf32>
    %cst_2 = arith.constant 1.57079637 : f32
    %cst_3 = arith.constant 0.000000e+00 : f32
    %12 = vector.broadcast %cst_2 : f32 to vector<8x1xf32>
    %13 = vector.broadcast %cst_3 : f32 to vector<8x1xf32>
    %14 = arith.select %2, %12, %13 : vector<8x1xi1>, vector<8x1xf32>
    %15 = vector.shape_cast %11 : vector<8x1xf32> to vector<8x1xf32>
    %16 = vector.broadcast %15 : vector<8x1xf32> to vector<8x128xf32>
    %17 = vector.shape_cast %14 : vector<8x1xf32> to vector<8x1xf32>
    %18 = vector.broadcast %17 : vector<8x1xf32> to vector<8x128xf32>
    %c0 = arith.constant 0 : index
    %c0_4 = arith.constant 0 : index
    %c0_5 = arith.constant 0 : index
    %19 = vector.load %arg2[%c0, %c0_4, %c0_5] : memref<1x3x128xf32, #tpu.memory_space<vmem>>, vector<1x1x128xf32>
    %20 = vector.shape_cast %19 : vector<1x1x128xf32> to vector<1x128xf32>
    %21 = vector.broadcast %20 : vector<1x128xf32> to vector<8x128xf32>
    %22 = arith.mulf %21, %16 : vector<8x128xf32>
    %23 = arith.addf %22, %18 : vector<8x128xf32>
    %24 = math.sin %23 : vector<8x128xf32>
    %c0_6 = arith.constant 0 : index
    %c0_7 = arith.constant 0 : index
    %c0_8 = arith.constant 0 : index
    %25 = vector.load %arg3[%c0_6, %c0_7, %c0_8] : memref<1x24x128xf32, #tpu.memory_space<vmem>>, vector<1x8x128xf32>
    %26 = vector.shape_cast %25 : vector<1x8x128xf32> to vector<8x128xf32>
    %27 = arith.addf %26, %24 : vector<8x128xf32>
    %28 = arith.mulf %27, %24 : vector<8x128xf32>
    %c0_9 = arith.constant 0 : index
    %c0_10 = arith.constant 0 : index
    %c0_11 = arith.constant 0 : index
    %29 = vector.load %arg4[%c0_9, %c0_10, %c0_11] : memref<1x24x128xf32, #tpu.memory_space<vmem>>, vector<1x8x128xf32>
    %30 = vector.shape_cast %29 : vector<1x8x128xf32> to vector<8x128xf32>
    %31 = vector.shape_cast %28 : vector<8x128xf32> to vector<1x8x128xf32>
    tpu.vector_store %arg4[%c0_9, %c0_10, %c0_11], %31 {strides = array<i32>} : memref<1x24x128xf32, #tpu.memory_space<vmem>>, vector<1x8x128xf32>,
    %c0_12 = arith.constant 0 : index
    %c1 = arith.constant 1 : index
    %c0_13 = arith.constant 0 : index
    %32 = vector.load %arg2[%c0_12, %c1, %c0_13] : memref<1x3x128xf32, #tpu.memory_space<vmem>>, vector<1x1x128xf32>
    %33 = vector.shape_cast %32 : vector<1x1x128xf32> to vector<1x128xf32>
    %34 = vector.broadcast %33 : vector<1x128xf32> to vector<8x128xf32>
    %35 = arith.mulf %34, %16 : vector<8x128xf32>
    %36 = arith.addf %35, %18 : vector<8x128xf32>
    %37 = math.sin %36 : vector<8x128xf32>
    %c0_14 = arith.constant 0 : index
    %c8 = arith.constant 8 : index
    %c0_15 = arith.constant 0 : index
    %38 = vector.load %arg3[%c0_14, %c8, %c0_15] : memref<1x24x128xf32, #tpu.memory_space<vmem>>, vector<1x8x128xf32>
    %39 = vector.shape_cast %38 : vector<1x8x128xf32> to vector<8x128xf32>
    %40 = arith.addf %39, %37 : vector<8x128xf32>
    %41 = arith.mulf %40, %37 : vector<8x128xf32>
    %c0_16 = arith.constant 0 : index
    %c8_17 = arith.constant 8 : index
    %c0_18 = arith.constant 0 : index
    %42 = vector.load %arg4[%c0_16, %c8_17, %c0_18] : memref<1x24x128xf32, #tpu.memory_space<vmem>>, vector<1x8x128xf32>
    %43 = vector.shape_cast %42 : vector<1x8x128xf32> to vector<8x128xf32>
    %44 = vector.shape_cast %41 : vector<8x128xf32> to vector<1x8x128xf32>
    tpu.vector_store %arg4[%c0_16, %c8_17, %c0_18], %44 {strides = array<i32>} : memref<1x24x128xf32, #tpu.memory_space<vmem>>, vector<1x8x128xf32>,
    %c0_19 = arith.constant 0 : index
    %c2 = arith.constant 2 : index
    %c0_20 = arith.constant 0 : index
    %45 = vector.load %arg2[%c0_19, %c2, %c0_20] : memref<1x3x128xf32, #tpu.memory_space<vmem>>, vector<1x1x128xf32>
    %46 = vector.shape_cast %45 : vector<1x1x128xf32> to vector<1x128xf32>
    %47 = vector.broadcast %46 : vector<1x128xf32> to vector<8x128xf32>
    %48 = arith.mulf %47, %16 : vector<8x128xf32>
    %49 = arith.addf %48, %18 : vector<8x128xf32>
    %50 = math.sin %49 : vector<8x128xf32>
    %c0_21 = arith.constant 0 : index
    %c16 = arith.constant 16 : index
    %c0_22 = arith.constant 0 : index
    %51 = vector.load %arg3[%c0_21, %c16, %c0_22] : memref<1x24x128xf32, #tpu.memory_space<vmem>>, vector<1x8x128xf32>
    %52 = vector.shape_cast %51 : vector<1x8x128xf32> to vector<8x128xf32>
    %53 = arith.addf %52, %50 : vector<8x128xf32>
    %54 = arith.mulf %53, %50 : vector<8x128xf32>
    %c0_23 = arith.constant 0 : index
    %c16_24 = arith.constant 16 : index
    %c0_25 = arith.constant 0 : index
    %55 = vector.load %arg4[%c0_23, %c16_24, %c0_25] : memref<1x24x128xf32, #tpu.memory_space<vmem>>, vector<1x8x128xf32>
    %56 = vector.shape_cast %55 : vector<1x8x128xf32> to vector<8x128xf32>
    %57 = vector.shape_cast %54 : vector<8x128xf32> to vector<1x8x128xf32>
    tpu.vector_store %arg4[%c0_23, %c16_24, %c0_25], %57 {strides = array<i32>} : memref<1x24x128xf32, #tpu.memory_space<vmem>>, vector<1x8x128xf32>,
    return
  }
  func.func @transform_0(%arg0: i32, %arg1: i32) -> (i32, i32, i32) {
    %c0_i32 = arith.constant 0 : i32
    %c0_i32_0 = arith.constant 0 : i32
    return %arg0, %c0_i32, %arg1 : i32, i32, i32
  }
  func.func @transform_1(%arg0: i32, %arg1: i32) -> (i32, i32, i32) {
    %c0_i32 = arith.constant 0 : i32
    %c0_i32_0 = arith.constant 0 : i32
    return %arg0, %c0_i32, %arg1 : i32, i32, i32
  }
  func.func @transform_2(%arg0: i32, %arg1: i32) -> (i32, i32, i32) {
    %c0_i32 = arith.constant 0 : i32
    %c0_i32_0 = arith.constant 0 : i32
    return %arg0, %c0_i32, %arg1 : i32, i32, i32
  }
}

</mosaic_0001>

<llo_original>
// kernel: pose_geo.1
$region0: #{pose_geo.1}
  #allocation0 [shape = 'u32[]', space=smem, size = 0x4, offset = 0x4, fixed_abs, tag = 'smem constant byte address 0x4 - core index']
  #allocation1 [shape = 'u32[144,128]{1,0:T(1,128)}', space=vmem, size = 0x12000, scoped, tag = 'internal scratch']
  %s0 = inlined_call_operand.vmem [shape: f32[2,3,128], index: 0, kind: input, shape index: {}]
  %s1 = inlined_call_operand.vmem [shape: f32[2,24,128], index: 1, kind: input, shape index: {}]
  %s2 = inlined_call_operand.vmem [shape: f32[2,24,128], index: 2, kind: output, shape index: {}]
  %s3 = sld [smem:[#allocation0]]
  $region41: #{pose_geo.1} parent=0
    _
  %s5 = ssub.s32 1, %s3
  %s6 = scalar_select 0, %s5, %s3
  loop: start=0, step=1, limit=4
  $region2: #{pose_geo.1} parent=0 // loop_pre_header
    _
  $region3: #{pose_geo.1} parent=0 // loop_header
    %s8 = sphi 0, %s12
    %p9 = scmp.ge.s32.totalorder %s8, 4
    %s15 = sphi 0, %s27
    %s16 = sphi 0, %s23
    %s17 = sphi 0, %s15
    %s18 = sphi 0, %s16
    %s19 = sphi 0, %s17
    %s20 = sphi 0, %s18
    %s32 = sphi 0, %s34
    %s35 = sphi 0, %s32
    %s36 = sphi 0, %s35
    %s52 = sphi 0, %s36
    %s60 = sphi 0, %s62
    %s63 = sphi 0, %s60
    %s64 = sphi 0, %s63
    %s80 = sphi 0, %s64
    %s88 = sphi 0, %s90
    %s91 = sphi 0, %s88
    %s92 = sphi 0, %s91
    %s108 = sphi 0, %s92
  $region4: #{pose_geo.1} parent=0 // loop_header_branch
    %11 = sbr.rel (%p9) target = $region8
  $region5: #{pose_geo.1} parent=0 // loop_body
    %s13 = ssub.s32 %s8, 1
    %s14 = ssub.s32 %s8, 2
    %s21 = sadd.s32 1, %s16
    %p22 = scmp.ge.s32.totalorder %s21, 1
    %s23 = scalar_select %p22, 0, %s21
    %s24 = sadd.s32 1, %s15
    %s25 = scalar_select %p22, %s24, %s15
    %p26 = scmp.ge.s32.totalorder %s25, 2
    %s27 = scalar_select %p26, 0, %s25
    %s28 = ssub.s32 %s15, %s27
    %s29 = ssub.s32 %s16, %s23
    %s30 = sor.u32 %s28, %s29
    %p31 = scmp.eq.s32.totalorder %s30, 0
    %s33 = sadd.s32 %s32, 1
    %s34 = scalar_select %p31, %s32, %s33
    %p37 = pneg %p31
    %p38 = scmp.eq.s32.totalorder %s8, 1
    %p39 = por %p37, %p38
    %p40 = scmp.ne.s32.totalorder %s32, %s35
    %p41 = scmp.eq.s32.totalorder %s8, 0
    %p42 = por %p40, %p41
    %p43 = scmp.ne.s32.totalorder %s32, %s35
    %p44 = scmp.eq.s32.totalorder %s13, 1
    %p45 = por %p43, %p44
    %p46 = scmp.ne.s32.totalorder %s35, %s36
    %p47 = scmp.eq.s32.totalorder %s13, 0
    %p48 = por %p46, %p47
    %p49 = scmp.ne.s32.totalorder %s35, %s36
    %p50 = scmp.eq.s32.totalorder %s14, 1
    %p51 = por %p49, %p50
    %p53 = scmp.ne.s32.totalorder %s36, %s52
    %p54 = scmp.eq.s32.totalorder %s14, 0
    %p55 = por %p53, %p54
    %s56 = ssub.s32 %s15, %s27
    %s57 = ssub.s32 %s16, %s23
    %s58 = sor.u32 %s56, %s57
    %p59 = scmp.eq.s32.totalorder %s58, 0
    %s61 = sadd.s32 %s60, 1
    %s62 = scalar_select %p59, %s60, %s61
    %p65 = pneg %p59
    %p66 = scmp.eq.s32.totalorder %s8, 1
    %p67 = por %p65, %p66
    %p68 = scmp.ne.s32.totalorder %s60, %s63
    %p69 = scmp.eq.s32.totalorder %s8, 0
    %p70 = por %p68, %p69
    %p71 = scmp.ne.s32.totalorder %s60, %s63
    %p72 = scmp.eq.s32.totalorder %s13, 1
    %p73 = por %p71, %p72
    %p74 = scmp.ne.s32.totalorder %s63, %s64
    %p75 = scmp.eq.s32.totalorder %s13, 0
    %p76 = por %p74, %p75
    %p77 = scmp.ne.s32.totalorder %s63, %s64
    %p78 = scmp.eq.s32.totalorder %s14, 1
    %p79 = por %p77, %p78
    %p81 = scmp.ne.s32.totalorder %s64, %s80
    %p82 = scmp.eq.s32.totalorder %s14, 0
    %p83 = por %p81, %p82
    %s84 = ssub.s32 %s15, %s27
    %s85 = ssub.s32 %s16, %s23
    %s86 = sor.u32 %s84, %s85
    %p87 = scmp.eq.s32.totalorder %s86, 0
    %s89 = sadd.s32 %s88, 1
    %s90 = scalar_select %p87, %s88, %s89
    %p93 = pneg %p87
    %p94 = scmp.eq.s32.totalorder %s8, 1
    %p95 = por %p93, %p94
    %p96 = scmp.ne.s32.totalorder %s88, %s91
    %p97 = scmp.eq.s32.totalorder %s8, 0
    %p98 = por %p96, %p97
    %p99 = scmp.ne.s32.totalorder %s88, %s91
    %p100 = scmp.eq.s32.totalorder %s13, 1
    %p101 = por %p99, %p100
    %p102 = scmp.ne.s32.totalorder %s91, %s92
    %p103 = scmp.eq.s32.totalorder %s13, 0
    %p104 = por %p102, %p103
    %p105 = scmp.ne.s32.totalorder %s91, %s92
    %p106 = scmp.eq.s32.totalorder %s14, 1
    %p107 = por %p105, %p106
    %p109 = scmp.ne.s32.totalorder %s92, %s108
    %p110 = scmp.eq.s32.totalorder %s14, 0
    %p111 = por %p109, %p110
    %p112 = scmp.le.s32.totalorder 1, %s8
    %p113 = scmp.lt.s32.totalorder %s8, 3
    %p114 = pnand %p112, %p113
    %p115 = pneg %p114
    // Predicated region
    $region9: #{pose_geo.1} parent=5 // pred_check
      _
    $region10: #{pose_geo.1} parent=5 // pred_check_branch
      %117 = sbr.rel (%p114) target = $region12
    $region11: #{pose_geo.1} parent=5 // pred_region
      %s118 = ssub.s32 %s8, 1
    $region12: #{pose_geo.1} parent=5 // pred_fallthru
      _
    %p119 = scmp.lt.s32.totalorder %s8, 2
    // Predicated region
    $region13: #{pose_geo.1} parent=5 // pred_check
      %p120 = pneg %p119
    $region14: #{pose_geo.1} parent=5 // pred_check_branch
      %122 = sbr.rel (%p120) target = $region16
    $region15: #{pose_geo.1} parent=5 // pred_region
      // Predicated region
      $region17: #{pose_geo.1} parent=15 // pred_check
        %p123 = pneg %p42
      $region18: #{pose_geo.1} parent=15 // pred_check_branch
        %125 = sbr.rel (%p123) target = $region20
      $region19: #{pose_geo.1} parent=15 // pred_region
        %p126 = scmp.lt.s32.totalorder %s15, 1
        %s127 = scalar_select %p126, %s15, 1
        %p128 = scmp.lt.s32.totalorder %s16, 0
        %s129 = scalar_select %p128, %s16, 0
        %s130 = sadd.s32 %s129, %s127
        %s131 = smul.addr %s130, 4
        %s132 = scalar_lea.vmem %s0, %s131
      $region20: #{pose_geo.1} parent=15 // pred_fallthru
        _
      // Predicated region
      $region21: #{pose_geo.1} parent=15 // pred_check
        %p133 = pneg %p70
      $region22: #{pose_geo.1} parent=15 // pred_check_branch
        %135 = sbr.rel (%p133) target = $region24
      $region23: #{pose_geo.1} parent=15 // pred_region
        %p136 = scmp.lt.s32.totalorder %s15, 1
        %s137 = scalar_select %p136, %s15, 1
        %p138 = scmp.lt.s32.totalorder %s16, 0
        %s139 = scalar_select %p138, %s16, 0
        %s140 = smul.addr %s137, 3
        %s141 = sadd.s32 %s139, %s140
        %s142 = smul.addr %s141, 8
        %s143 = scalar_lea.vmem %s1, %s142
      $region24: #{pose_geo.1} parent=15 // pred_fallthru
        _
    $region16: #{pose_geo.1} parent=5 // pred_fallthru
      _
    %p144 = scmp.le.s32.totalorder 1, %s8
    %p145 = scmp.lt.s32.totalorder %s8, 3
    %p146 = pnand %p144, %p145
    %p147 = pneg %p146
    // Predicated region
    $region25: #{pose_geo.1} parent=5 // pred_check
      _
    $region26: #{pose_geo.1} parent=5 // pred_check_branch
      %149 = sbr.rel (%p146) target = $region28
    $region27: #{pose_geo.1} parent=5 // pred_region
      %s150 = ssub.s32 %s8, 1
      %p151 = scmp.lt.s32.totalorder %s17, 1
      %s152 = scalar_select %p151, %s17, 1
      %p153 = scmp.lt.s32.totalorder %s18, 0
      %s154 = scalar_select %p153, %s18, 0
      %s155 = sadd.s32 %s154, %s152
      %s156 = smul.addr %s155, 4
      %s157 = scalar_lea.vmem %s0, %s156
      %p158 = pneg %p48
      %p159 = pneg %p45
      %p160 = scmp.lt.s32.totalorder %s17, 1
      %s161 = scalar_select %p160, %s17, 1
      %p162 = scmp.lt.s32.totalorder %s18, 0
      %s163 = scalar_select %p162, %s18, 0
      %s164 = smul.addr %s161, 3
      %s165 = sadd.s32 %s163, %s164
      %s166 = smul.addr %s165, 8
      %s167 = scalar_lea.vmem %s1, %s166
      %p168 = pneg %p76
      %p169 = pneg %p73
      %p170 = pneg %p104
      %p171 = pneg %p101
      %p172 = scmp.lt.s32.totalorder %s17, 1
      %s173 = scalar_select %p172, %s17, 1
      %p174 = scmp.lt.s32.totalorder %s18, 0
      %s175 = scalar_select %p174, %s18, 0
      %s176 = smul.addr %s173, 3
      %s177 = sadd.s32 %s175, %s176
      %s178 = smul.addr %s177, 8
      %s179 = scalar_lea.vmem %s2, %s178
      %p180 = scmp.lt.s32.totalorder %s17, 1
      %s181 = scalar_select %p180, %s17, 1
      %p182 = scmp.lt.s32.totalorder %s18, 0
      %s183 = scalar_select %p182, %s18, 0
      %s184 = sadd.s32 %s183, %s181
      %s185 = smul.addr %s184, 4
      %s186 = scalar_lea.vmem %s0, %s185
      %p187 = scmp.lt.s32.totalorder %s17, 1
      %s188 = scalar_select %p187, %s17, 1
      %p189 = scmp.lt.s32.totalorder %s18, 0
      %s190 = scalar_select %p189, %s18, 0
      %s191 = smul.addr %s188, 3
      %s192 = sadd.s32 %s190, %s191
      %s193 = smul.addr %s192, 8
      %s194 = scalar_lea.vmem %s1, %s193
      %p195 = scmp.lt.s32.totalorder %s17, 1
      %s196 = scalar_select %p195, %s17, 1
      %p197 = scmp.lt.s32.totalorder %s18, 0
      %s198 = scalar_select %p197, %s18, 0
      %s199 = smul.addr %s196, 3
      %s200 = sadd.s32 %s198, %s199
      %s201 = smul.addr %s200, 8
      %s202 = scalar_lea.vmem %s2, %s201
      %v203 = vlaneseq
      %v204 = vshrl.u32 %v203, 7
      %vm205 = vcmp.ge.s32.totalorder %v204, 4
      %v206 = vsub.s32 %v204, 4
      %v207 = vsel %vm205, %v206, %v204
      %v208 = vcvt.s32.f32 %v207
      %v209 = vmul.f32 %v208, -1.7269388
      %v210 = vmul.f32 %v209, 1.442695
      %v211 = vpow.pop %v210
      %v212 = vmul.f32 %v211, 100.0
      %v213 = vsel %vm205, 1.5707964, 0.0
      %v214 = vld [vmem:[%s186] sm:$0x1]
      %v215 = vlaneseq
      %v216 = vshrl.u32 %v215, 7
      %v217 = vsub.s32 0, %v216
      %v218 = vrot.slane %v214, %v217
      %v219 = vmul.f32 %v218, %v212
      %v220 = vadd.f32 %v219, %v213
      %v221 = vand.u32 2147483647, %v220
      %vm222 = vcmp.le.f32.partialorder %v221, 0.7853982
      %vm223 = vcmp.lt.s32.totalorder %v220, 0
      %v224 = vand.u32 %v220, 2139095040
      %v225 = vshrl.u32 %v224, 23
      %v226 = vsub.s32 %v225, 127
      %v227 = vand.u32 2147483647, %v220
      %v228 = vand.u32 %v227, 8388607
      %v229 = vor.u32 %v228, 8388608
      %v230 = vsub.s32 0, %v229
      %v231 = vadd.s32 %v226, 1
      %vm232 = vcmp.gt.s32.totalorder %v231, 0
      %v233 = vsel %vm232, %v231, 0
      %v234 = vshrl.u32 %v233, 5
      %v235 = vand.u32 %v233, 31
      %v236 = vsub.s32 32, %v235
      %v237 = vshrl.u32 683565275, %v236
      %v238 = vshll.u32 683565275, %v235
      %v239 = vshrl.u32 2475754826, %v236
      %v240 = vor.u32 %v238, %v239
      %v241 = vshll.u32 2475754826, %v235
      %v242 = vshrl.u32 2131351028, %v236
      %v243 = vor.u32 %v241, %v242
      %v244 = vshll.u32 2131351028, %v235
      %v245 = vshrl.u32 2102212464, %v236
      %v246 = vor.u32 %v244, %v245
      %v247 = vshll.u32 2102212464, %v235
      %v248 = vshrl.u32 920167782, %v236
      %v249 = vor.u32 %v247, %v248
      %v250 = vshll.u32 920167782, %v235
      %v251 = vshrl.u32 1326507024, %v236
      %v252 = vor.u32 %v250, %v251
      %vm253 = vcmp.lt.s32.totalorder %v234, 1
      %vm254 = vcmp.lt.s32.totalorder %v234, 2
      %vm255 = vcmp.lt.s32.totalorder %v234, 3
      %vm256 = vcmp.lt.s32.totalorder %v234, 4
      %v257 = vsel %vm253, %v237, %v240
      %v258 = vsel %vm256, %v246, 2102212464
      %v259 = vsel %vm255, %v243, %v258
      %v260 = vsel %vm254, %v257, %v259
      %v261 = vsel %vm253, %v240, %v243
      %v262 = vsel %vm256, %v249, 920167782
      %v263 = vsel %vm255, %v246, %v262
      %v264 = vsel %vm254, %v261, %v263
      %v265 = vsel %vm253, %v243, %v246
      %v266 = vsel %vm256, %v252, 1326507024
      %v267 = vsel %vm255, %v249, %v266
      %v268 = vsel %vm254, %v265, %v267
      %v269 = vshll.u32 %v229, 8
      %v270 = vmul.u32.u64.compose %v269, %v268
      %v271 = vextract.low.u32 %v270
      %v272 = vextract.high.u32 %v270
      %v273 = vmul.u32.u64.compose %v269, %v264
      %v274 = vextract.low.u32 %v273
      %v275 = vextract.high.u32 %v273
      %v276 = vmul.u32 %v269, %v260
      %v277 = vadd.s32 %v272, %v274
      %vm278 = vc.u32 %v272, %v274
      %v279 = vadd.s32 %v275, 1
      %v280 = vsel %vm278, %v279, %v275
      %v281 = vadd.s32 %v276, %v280
      %v282 = vadd.s32 %v281, 536870912
      %v283 = vshrl.u32 %v282, 30
      %v284 = vshll.u32 %v283, 30
      %v285 = vsub.s32 %v281, %v284
      %vm286 = vcmp.lt.s32.totalorder %v285, 0
      %v287 = vsub.s32 0, %v285
      %v288 = vsel %vm286, %v287, %v285
      %v289 = vclz %v288
      %v290 = vsub.s32 %v289, 2
      %vm291 = vcmp.gt.s32.totalorder 0, %v290
      %v292 = vsel %vm291, 0, %v290
      %v293 = vsub.s32 32, %v292
      %v294 = vshll.u32 %v285, %v292
      %v295 = vshrl.u32 %v277, %v293
      %v296 = vor.u32 %v294, %v295
      %v297 = vsub.s32 4294967266, %v292
      %v298 = vadd.s32 %v297, 127
      %v299 = vshll.u32 %v298, 23
      %v300 = vor.u32 4788187, %v299
      %v301 = vand.u32 2147483647, %v300
      %v303 = vcvt.s32.f32 %v296
      %v304 = vmul.f32 %v303, %v301
      %v305 = vxor.u32 %v304, 2147483648
      %v306 = vsel %vm223, %v305, %v304
      %v307 = vsub.s32 4, %v283
      %v308 = vsel %vm223, %v307, %v283
      %v309 = vsel %vm222, %v220, %v306
      %v310 = vsel %vm222, 0, %v308
      %v311 = vcosq.f32.pop %v309
      %v312 = vsinq.f32.pop %v309
      %vm313 = vweird.f32 %v220
      %v314 = vadd.s32 %v310, 3
      %v315 = vand.u32 %v314, 3
      %vm316 = vcmp.lt.s32.totalorder %v315, 2
      %vm317 = vcmp.eq.s32.totalorder %v315, 0
      %v318 = vxor.u32 %v312, 2147483648
      %v319 = vsel %vm317, %v311, %v318
      %vm320 = vcmp.eq.s32.totalorder %v315, 2
      %v321 = vxor.u32 %v311, 2147483648
      %v322 = vsel %vm320, %v321, %v312
      %v323 = vsel %vm316, %v319, %v322
      %v324 = vsel %vm313, nan, %v323
      %v325 = vld [vmem:[%s194] sm:$0xff]
      %v326 = vadd.f32 %v325, %v324
      %v327 = vmul.f32 %v326, %v324
      %328 = vst [vmem:[%s202] sm:$0xff] %v327
      %v329 = vld [vmem:[%s186 + $0x1] sm:$0x1]
      %v330 = vlaneseq
      %v331 = vshrl.u32 %v330, 7
      %v332 = vsub.s32 0, %v331
      %v333 = vrot.slane %v329, %v332
      %v334 = vmul.f32 %v333, %v212
      %v335 = vadd.f32 %v334, %v213
      %v336 = vand.u32 2147483647, %v335
      %vm337 = vcmp.le.f32.partialorder %v336, 0.7853982
      %vm338 = vcmp.lt.s32.totalorder %v335, 0
      %v339 = vand.u32 %v335, 2139095040
      %v340 = vshrl.u32 %v339, 23
      %v341 = vsub.s32 %v340, 127
      %v342 = vand.u32 2147483647, %v335
      %v343 = vand.u32 %v342, 8388607
      %v344 = vor.u32 %v343, 8388608
      %v345 = vsub.s32 0, %v344
      %v346 = vadd.s32 %v341, 1
      %vm347 = vcmp.gt.s32.totalorder %v346, 0
      %v348 = vsel %vm347, %v346, 0
      %v349 = vshrl.u32 %v348, 5
      %v350 = vand.u32 %v348, 31
      %v351 = vsub.s32 32, %v350
      %v352 = vshrl.u32 683565275, %v351
      %v353 = vshll.u32 683565275, %v350
      %v354 = vshrl.u32 2475754826, %v351
      %v355 = vor.u32 %v353, %v354
      %v356 = vshll.u32 2475754826, %v350
      %v357 = vshrl.u32 2131351028, %v351
      %v358 = vor.u32 %v356, %v357
      %v359 = vshll.u32 2131351028, %v350
      %v360 = vshrl.u32 2102212464, %v351
      %v361 = vor.u32 %v359, %v360
      %v362 = vshll.u32 2102212464, %v350
      %v363 = vshrl.u32 920167782, %v351
      %v364 = vor.u32 %v362, %v363
      %v365 = vshll.u32 920167782, %v350
      %v366 = vshrl.u32 1326507024, %v351
      %v367 = vor.u32 %v365, %v366
      %vm368 = vcmp.lt.s32.totalorder %v349, 1
      %vm369 = vcmp.lt.s32.totalorder %v349, 2
      %vm370 = vcmp.lt.s32.totalorder %v349, 3
      %vm371 = vcmp.lt.s32.totalorder %v349, 4
      %v372 = vsel %vm368, %v352, %v355
      %v373 = vsel %vm371, %v361, 2102212464
      %v374 = vsel %vm370, %v358, %v373
      %v375 = vsel %vm369, %v372, %v374
      %v376 = vsel %vm368, %v355, %v358
      %v377 = vsel %vm371, %v364, 920167782
      %v378 = vsel %vm370, %v361, %v377
      %v379 = vsel %vm369, %v376, %v378
      %v380 = vsel %vm368, %v358, %v361
      %v381 = vsel %vm371, %v367, 1326507024
      %v382 = vsel %vm370, %v364, %v381
      %v383 = vsel %vm369, %v380, %v382
      %v384 = vshll.u32 %v344, 8
      %v385 = vmul.u32.u64.compose %v384, %v383
      %v386 = vextract.low.u32 %v385
      %v387 = vextract.high.u32 %v385
      %v388 = vmul.u32.u64.compose %v384, %v379
      %v389 = vextract.low.u32 %v388
      %v390 = vextract.high.u32 %v388
      %v391 = vmul.u32 %v384, %v375
      %v392 = vadd.s32 %v387, %v389
      %vm393 = vc.u32 %v387, %v389
      %v394 = vadd.s32 %v390, 1
      %v395 = vsel %vm393, %v394, %v390
      %v396 = vadd.s32 %v391, %v395
      %v397 = vadd.s32 %v396, 536870912
      %v398 = vshrl.u32 %v397, 30
      %v399 = vshll.u32 %v398, 30
      %v400 = vsub.s32 %v396, %v399
      %vm401 = vcmp.lt.s32.totalorder %v400, 0
      %v402 = vsub.s32 0, %v400
      %v403 = vsel %vm401, %v402, %v400
      %v404 = vclz %v403
      %v405 = vsub.s32 %v404, 2
      %vm406 = vcmp.gt.s32.totalorder 0, %v405
      %v407 = vsel %vm406, 0, %v405
      %v408 = vsub.s32 32, %v407
      %v409 = vshll.u32 %v400, %v407
      %v410 = vshrl.u32 %v392, %v408
      %v411 = vor.u32 %v409, %v410
      %v412 = vsub.s32 4294967266, %v407
      %v413 = vadd.s32 %v412, 127
      %v414 = vshll.u32 %v413, 23
      %v415 = vor.u32 4788187, %v414
      %v416 = vand.u32 2147483647, %v415
      %v418 = vcvt.s32.f32 %v411
      %v419 = vmul.f32 %v418, %v416
      %v420 = vxor.u32 %v419, 2147483648
      %v421 = vsel %vm338, %v420, %v419
      %v422 = vsub.s32 4, %v398
      %v423 = vsel %vm338, %v422, %v398
      %v424 = vsel %vm337, %v335, %v421
      %v425 = vsel %vm337, 0, %v423
      %v426 = vcosq.f32.pop %v424
      %v427 = vsinq.f32.pop %v424
      %vm428 = vweird.f32 %v335
      %v429 = vadd.s32 %v425, 3
      %v430 = vand.u32 %v429, 3
      %vm431 = vcmp.lt.s32.totalorder %v430, 2
      %vm432 = vcmp.eq.s32.totalorder %v430, 0
      %v433 = vxor.u32 %v427, 2147483648
      %v434 = vsel %vm432, %v426, %v433
      %vm435 = vcmp.eq.s32.totalorder %v430, 2
      %v436 = vxor.u32 %v426, 2147483648
      %v437 = vsel %vm435, %v436, %v427
      %v438 = vsel %vm431, %v434, %v437
      %v439 = vsel %vm428, nan, %v438
      %v440 = vld [vmem:[%s194 + $0x8] sm:$0xff]
      %v441 = vadd.f32 %v440, %v439
      %v442 = vmul.f32 %v441, %v439
      %443 = vst [vmem:[%s202 + $0x8] sm:$0xff] %v442
      %v444 = vld [vmem:[%s186 + $0x2] sm:$0x1]
      %v445 = vlaneseq
      %v446 = vshrl.u32 %v445, 7
      %v447 = vsub.s32 0, %v446
      %v448 = vrot.slane %v444, %v447
      %v449 = vmul.f32 %v448, %v212
      %v450 = vadd.f32 %v449, %v213
      %v451 = vand.u32 2147483647, %v450
      %vm452 = vcmp.le.f32.partialorder %v451, 0.7853982
      %vm453 = vcmp.lt.s32.totalorder %v450, 0
      %v454 = vand.u32 %v450, 2139095040
      %v455 = vshrl.u32 %v454, 23
      %v456 = vsub.s32 %v455, 127
      %v457 = vand.u32 2147483647, %v450
      %v458 = vand.u32 %v457, 8388607
      %v459 = vor.u32 %v458, 8388608
      %v460 = vsub.s32 0, %v459
      %v461 = vadd.s32 %v456, 1
      %vm462 = vcmp.gt.s32.totalorder %v461, 0
      %v463 = vsel %vm462, %v461, 0
      %v464 = vshrl.u32 %v463, 5
      %v465 = vand.u32 %v463, 31
      %v466 = vsub.s32 32, %v465
      %v467 = vshrl.u32 683565275, %v466
      %v468 = vshll.u32 683565275, %v465
      %v469 = vshrl.u32 2475754826, %v466
      %v470 = vor.u32 %v468, %v469
      %v471 = vshll.u32 2475754826, %v465
      %v472 = vshrl.u32 2131351028, %v466
      %v473 = vor.u32 %v471, %v472
      %v474 = vshll.u32 2131351028, %v465
      %v475 = vshrl.u32 2102212464, %v466
      %v476 = vor.u32 %v474, %v475
      %v477 = vshll.u32 2102212464, %v465
      %v478 = vshrl.u32 920167782, %v466
      %v479 = vor.u32 %v477, %v478
      %v480 = vshll.u32 920167782, %v465
      %v481 = vshrl.u32 1326507024, %v466
      %v482 = vor.u32 %v480, %v481
      %vm483 = vcmp.lt.s32.totalorder %v464, 1
      %vm484 = vcmp.lt.s32.totalorder %v464, 2
      %vm485 = vcmp.lt.s32.totalorder %v464, 3
      %vm486 = vcmp.lt.s32.totalorder %v464, 4
      %v487 = vsel %vm483, %v467, %v470
      %v488 = vsel %vm486, %v476, 2102212464
      %v489 = vsel %vm485, %v473, %v488
      %v490 = vsel %vm484, %v487, %v489
      %v491 = vsel %vm483, %v470, %v473
      %v492 = vsel %vm486, %v479, 920167782
      %v493 = vsel %vm485, %v476, %v492
      %v494 = vsel %vm484, %v491, %v493
      %v495 = vsel %vm483, %v473, %v476
      %v496 = vsel %vm486, %v482, 1326507024
      %v497 = vsel %vm485, %v479, %v496
      %v498 = vsel %vm484, %v495, %v497
      %v499 = vshll.u32 %v459, 8
      %v500 = vmul.u32.u64.compose %v499, %v498
      %v501 = vextract.low.u32 %v500
      %v502 = vextract.high.u32 %v500
      %v503 = vmul.u32.u64.compose %v499, %v494
      %v504 = vextract.low.u32 %v503
      %v505 = vextract.high.u32 %v503
      %v506 = vmul.u32 %v499, %v490
      %v507 = vadd.s32 %v502, %v504
      %vm508 = vc.u32 %v502, %v504
      %v509 = vadd.s32 %v505, 1
      %v510 = vsel %vm508, %v509, %v505
      %v511 = vadd.s32 %v506, %v510
      %v512 = vadd.s32 %v511, 536870912
      %v513 = vshrl.u32 %v512, 30
      %v514 = vshll.u32 %v513, 30
      %v515 = vsub.s32 %v511, %v514
      %vm516 = vcmp.lt.s32.totalorder %v515, 0
      %v517 = vsub.s32 0, %v515
      %v518 = vsel %vm516, %v517, %v515
      %v519 = vclz %v518
      %v520 = vsub.s32 %v519, 2
      %vm521 = vcmp.gt.s32.totalorder 0, %v520
      %v522 = vsel %vm521, 0, %v520
      %v523 = vsub.s32 32, %v522
      %v524 = vshll.u32 %v515, %v522
      %v525 = vshrl.u32 %v507, %v523
      %v526 = vor.u32 %v524, %v525
      %v527 = vsub.s32 4294967266, %v522
      %v528 = vadd.s32 %v527, 127
      %v529 = vshll.u32 %v528, 23
      %v530 = vor.u32 4788187, %v529
      %v531 = vand.u32 2147483647, %v530
      %v533 = vcvt.s32.f32 %v526
      %v534 = vmul.f32 %v533, %v531
      %v535 = vxor.u32 %v534, 2147483648
      %v536 = vsel %vm453, %v535, %v534
      %v537 = vsub.s32 4, %v513
      %v538 = vsel %vm453, %v537, %v513
      %v539 = vsel %vm452, %v450, %v536
      %v540 = vsel %vm452, 0, %v538
      %v541 = vcosq.f32.pop %v539
      %v542 = vsinq.f32.pop %v539
      %vm543 = vweird.f32 %v450
      %v544 = vadd.s32 %v540, 3
      %v545 = vand.u32 %v544, 3
      %vm546 = vcmp.lt.s32.totalorder %v545, 2
      %vm547 = vcmp.eq.s32.totalorder %v545, 0
      %v548 = vxor.u32 %v542, 2147483648
      %v549 = vsel %vm547, %v541, %v548
      %vm550 = vcmp.eq.s32.totalorder %v545, 2
      %v551 = vxor.u32 %v541, 2147483648
      %v552 = vsel %vm550, %v551, %v542
      %v553 = vsel %vm546, %v549, %v552
      %v554 = vsel %vm543, nan, %v553
      %v555 = vld [vmem:[%s194 + $0x10] sm:$0xff]
      %v556 = vadd.f32 %v555, %v554
      %v557 = vmul.f32 %v556, %v554
      %558 = vst [vmem:[%s202 + $0x10] sm:$0xff] %v557
      %p559 = scmp.lt.s32.totalorder %s17, 1
      %s560 = scalar_select %p559, %s17, 1
      %p561 = scmp.lt.s32.totalorder %s18, 0
      %s562 = scalar_select %p561, %s18, 0
      %s563 = smul.addr %s560, 3
      %s564 = sadd.s32 %s562, %s563
      %s565 = smul.addr %s564, 8
      %s566 = scalar_lea.vmem %s2, %s565
      // Predicated region
      $region29: #{pose_geo.1} parent=27 // pred_check
        %p567 = pneg %p101
      $region30: #{pose_geo.1} parent=27 // pred_check_branch
        %569 = sbr.rel (%p567) target = $region32
      $region31: #{pose_geo.1} parent=27 // pred_region
        _
      $region32: #{pose_geo.1} parent=27 // pred_fallthru
        _
    $region28: #{pose_geo.1} parent=5 // pred_fallthru
      _
    %p570 = scmp.le.s32.totalorder 2, %s8
    // Predicated region
    $region33: #{pose_geo.1} parent=5 // pred_check
      %p571 = pneg %p570
    $region34: #{pose_geo.1} parent=5 // pred_check_branch
      %573 = sbr.rel (%p571) target = $region36
    $region35: #{pose_geo.1} parent=5 // pred_region
      %s574 = ssub.s32 %s8, 2
      // Predicated region
      $region37: #{pose_geo.1} parent=35 // pred_check
        %p575 = pneg %p107
      $region38: #{pose_geo.1} parent=35 // pred_check_branch
        %577 = sbr.rel (%p575) target = $region40
      $region39: #{pose_geo.1} parent=35 // pred_region
        %p578 = scmp.lt.s32.totalorder %s19, 1
        %s579 = scalar_select %p578, %s19, 1
        %p580 = scmp.lt.s32.totalorder %s20, 0
        %s581 = scalar_select %p580, %s20, 0
        %s582 = smul.addr %s579, 3
        %s583 = sadd.s32 %s581, %s582
        %s584 = smul.addr %s583, 8
        %s585 = scalar_lea.vmem %s2, %s584
      $region40: #{pose_geo.1} parent=35 // pred_fallthru
        _
    $region36: #{pose_geo.1} parent=5 // pred_fallthru
      _
  $region6: #{pose_geo.1} parent=0 // loop_footer
    %s12 = sadd.s32 1, %s8
  $region7: #{pose_geo.1} parent=0 // loop_footer_branch
    %7 = sbr.rel target = $region3
  $region8: #{pose_geo.1} parent=0 // loop_exit
    _

</llo_original>
